<compile_context>
chip_gen: v7x
topology: tpu7x:2x2x1
jax: 0.10.0
libtpu: 0.0.40
codegen_flags: <defaults>
</compile_context>

<pallas_src>
import jax
import jax.numpy as jnp
from jax import lax
from jax.experimental import pallas as pl
from jax.experimental.pallas import tpu as pltpu

K = 7     # conv kernel size
PAD = 3   # "same" padding for 7x7 / stride 1


def _make_sam_kernel(C, H, W, HWp, pow2_w):
    HW = H * W

    def kernel(*refs):
        if pow2_w:
            w_ref, b_ref, rgb_ref, t_ref, rgb_out_ref, t_out_ref = refs
            col_ref = None
        else:
            w_ref, b_ref, col_ref, rgb_ref, t_ref, rgb_out_ref, t_out_ref = refs

        io_dtype = rgb_out_ref.dtype

        # Channel-wise max of concat([rgb, t], channel) in the input dtype
        # (max is exact in any dtype); only the (Nb, HWp) map is cast to f32.
        m = jnp.maximum(jnp.max(rgb_ref[...], axis=1),
                        jnp.max(t_ref[...], axis=1)).astype(jnp.float32)

        pos = lax.broadcasted_iota(jnp.int32, (1, HWp), 1)   # flat position
        if pow2_w:
            col = pos & (W - 1)                               # VPU AND, no extra input
        else:
            col = col_ref[...]                                # (1, HWp) int32 fallback

        # Hoist the 49 weight scalars + bias (SMEM reads) out of the loops.
        w = [w_ref[i] for i in range(K * K)]
        bias = b_ref[0]

        # Per-offset validity masks (data independent, VPU only).
        row_ok, col_ok = [], []
        for d in range(K):
            off = d - PAD
            row_ok.append((pos >= max(0, -off) * W) & (pos < (H - max(0, off)) * W))
            col_ok.append((col >= max(0, -off)) & (col < W - max(0, off)))

        # --- Column pass: tap[p] = m[p + (dj-PAD)], masked to zero outside the
        # row. Row shifts are multiples of W, so these pre-applied column masks
        # stay valid after the row roll below.
        u = []
        for dj in range(K):
            off = dj - PAD
            tap = m if off == 0 else pltpu.roll(m, shift=(-off) % HWp, axis=1)
            if off != 0:
                tap = jnp.where(col_ok[dj], tap, 0.0)
            u.append(tap)

        # --- Row pass: per-row weighted sum (pure VPU), then one roll + mask
        # per row. Total cross-lane rolls: <=12 instead of 49.
        acc = jnp.full(m.shape, bias, dtype=jnp.float32)
        for di in range(K):
            off = di - PAD
            partial = u[0] * w[di * K]
            for dj in range(1, K):
                partial = partial + u[dj] * w[di * K + dj]
            if off != 0:
                partial = pltpu.roll(partial, shift=(-(off * W)) % HWp, axis=1)
                partial = jnp.where(row_ok[di], partial, 0.0)
            acc = acc + partial

        gate = jax.nn.sigmoid(acc)                            # (Nb, HWp) f32
        g_rgb = gate.astype(io_dtype)[:, None, :]             # cast once, then
        g_t = (1.0 - gate).astype(io_dtype)[:, None, :]       # multiply in io dtype

        rgb_out_ref[...] = rgb_ref[...] * g_rgb
        t_out_ref[...] = t_ref[...] * g_t

    return kernel


def sam_forward(rgb, t, w_flat, b):
    N, C, H, W = rgb.shape
    HW = H * W
    io_dtype = rgb.dtype
    itemsize = jnp.dtype(io_dtype).itemsize

    # Lane-dense flat spatial view; pad HW to a multiple of 128 if needed so
    # stores are never masked partial vst.
    HWp = ((HW + 127) // 128) * 128
    rgb3 = rgb.reshape(N, C, HW)
    t3 = t.reshape(N, C, HW)
    if HWp != HW:
        padding = ((0, 0), (0, 0), (0, HWp - HW))
        rgb3 = jnp.pad(rgb3, padding)
        t3 = jnp.pad(t3, padding)

    pow2_w = (W & (W - 1)) == 0

    # Generation-aware VMEM budget (v7x has 64 MiB physical vs 128 on v5e/v6e).
    try:
        vmem_phys = int(pltpu.get_tpu_info().vmem_capacity_bytes)
    except Exception:
        vmem_phys = 64 * 1024 * 1024
    vmem_limit = int(min(96 * 1024 * 1024, (vmem_phys * 5) // 8))

    # Batch-block size: amortise the ~0.35us/step overhead while keeping
    # 2 inputs + 2 outputs, double-buffered, inside half the VMEM budget.
    bytes_per_elem = C * HWp * itemsize
    nb_cap = max(1, (vmem_limit // 2) // (8 * bytes_per_elem))
    Nb = 1
    for d in range(1, N + 1):
        if N % d == 0 and d <= nb_cap:
            Nb = d
    grid = (N // Nb,)

    img_spec = pl.BlockSpec((Nb, C, HWp), lambda n: (n, 0, 0))
    smem_spec = pl.BlockSpec(memory_space=pltpu.MemorySpace.SMEM)

    in_specs = [smem_spec, smem_spec]
    args = [w_flat.astype(jnp.float32), b.astype(jnp.float32)]
    if not pow2_w:
        col_idx = (jnp.arange(HWp, dtype=jnp.int32) % W).reshape(1, HWp)
        in_specs.append(pl.BlockSpec((1, HWp), lambda n: (0, 0)))
        args.append(col_idx)
    in_specs += [img_spec, img_spec]
    args += [rgb3, t3]

    cost = pl.CostEstimate(
        flops=int(N * HW * (2 * K * K + 4 * C + 2)),
        transcendentals=int(N * HW),
        bytes_accessed=int(4 * N * C * HWp * itemsize + (K * K + 1) * 4))

    # TODO(synk): for very large C*H*W (v7x 64 MiB VMEM) split into a C-tiled
    # gate pass + a C-tiled apply pass (two pallas_calls) and add a second
    # "parallel" grid axis so both v7x TensorCores stay busy even when N == 1.
    rgb_out3, t_out3 = pl.pallas_call(
        _make_sam_kernel(C, H, W, HWp, pow2_w),
        out_shape=(jax.ShapeDtypeStruct((N, C, HWp), io_dtype),
                   jax.ShapeDtypeStruct((N, C, HWp), io_dtype)),
        grid=grid,
        in_specs=in_specs,
        out_specs=(img_spec, img_spec),
        compiler_params=pltpu.CompilerParams(
            dimension_semantics=("parallel",),
            vmem_limit_bytes=vmem_limit),
        cost_estimate=cost,
    )(*args)

    if HWp != HW:
        rgb_out3 = rgb_out3[:, :, :HW]
        t_out3 = t_out3[:, :, :HW]
    return rgb_out3.reshape(N, C, H, W), t_out3.reshape(N, C, H, W)


def sam_reference(rgb, t, w_flat, b):
    """Pure-JAX reference matching the PyTorch forward."""
    m = jnp.max(jnp.concatenate([rgb, t], axis=1), axis=1, keepdims=True)
    w = w_flat.reshape(1, 1, K, K)
    out1 = lax.conv_general_dilated(
        m, w, window_strides=(1, 1), padding=[(PAD, PAD), (PAD, PAD)],
        dimension_numbers=("NCHW", "OIHW", "NCHW")) + b.reshape(1, 1, 1, 1)
    weight_rgb = jax.nn.sigmoid(out1)
    return rgb * weight_rgb, t * (1.0 - weight_rgb)


if __name__ == "__main__":
    key = jax.random.PRNGKey(0)
    kw, kb, kr, kt = jax.random.split(key, 4)

    # Conv2d(1, 1, 7, 1, 3) parameters, PyTorch-style uniform init: U(-1/7, 1/7)
    bound = 1.0 / (K * K) ** 0.5
    w_flat = jax.random.uniform(kw, (K * K,), jnp.float32, -bound, bound)
    b = jax.random.uniform(kb, (1,), jnp.float32, -bound, bound)

    N, C, H, W = 2, 4, 16, 16
    rgb = jax.random.normal(kr, (N, C, H, W), jnp.float32)
    t = jax.random.normal(kt, (N, C, H, W), jnp.float32)

    fwd = jax.jit(sam_forward)
    rgb_out, t_out = fwd(rgb, t, w_flat, b)
    jax.block_until_ready((rgb_out, t_out))

    rgb_ref, t_ref = sam_reference(rgb, t, w_flat, b)
    assert jnp.allclose(rgb_out, rgb_ref, atol=1e-5, rtol=1e-5), "rgb_out mismatch"
    assert jnp.allclose(t_out, t_ref, atol=1e-5, rtol=1e-5), "t_out mismatch"

    print("KERNEL_OK")
</pallas_src>

<mosaic_0001>
module attributes {stable_mosaic.version = 11 : i64} {
  func.func @kernel(%arg0: i32, %arg1: memref<49xf32, #tpu.memory_space<smem>>, %arg2: memref<1xf32, #tpu.memory_space<smem>>, %arg3: memref<2x4x256xf32, #tpu.memory_space<vmem>>, %arg4: memref<2x4x256xf32, #tpu.memory_space<vmem>>, %arg5: memref<2x4x256xf32, #tpu.memory_space<vmem>>, %arg6: memref<2x4x256xf32, #tpu.memory_space<vmem>>) attributes {dimension_semantics = [#tpu.dimension_semantics<parallel>], iteration_bounds = array<i64: 1>, scalar_prefetch = 0 : i64, scratch_operands = 0 : i64, tpu.core_type = #tpu.core_type<tc>, window_params = [{transform_indices = @transform_0, window_bounds = array<i64: 49>}, {transform_indices = @transform_1, window_bounds = array<i64: 1>}, {transform_indices = @transform_2, window_bounds = array<i64: 2, 4, 256>}, {transform_indices = @transform_3, window_bounds = array<i64: 2, 4, 256>}, {transform_indices = @transform_4, window_bounds = array<i64: 2, 4, 256>}, {transform_indices = @transform_5, window_bounds = array<i64: 2, 4, 256>}]} {
    %c0 = arith.constant 0 : index
    %c0_0 = arith.constant 0 : index
    %c0_1 = arith.constant 0 : index
    %0 = vector.load %arg3[%c0, %c0_0, %c0_1] : memref<2x4x256xf32, #tpu.memory_space<vmem>>, vector<2x4x256xf32>
    %cst = arith.constant dense<0xFF800000> : vector<2x256xf32>
    %1 = vector.multi_reduction <maximumf>, %0, %cst [1] : vector<2x4x256xf32> to vector<2x256xf32>
    %c0_2 = arith.constant 0 : index
    %c0_3 = arith.constant 0 : index
    %c0_4 = arith.constant 0 : index
    %2 = vector.load %arg4[%c0_2, %c0_3, %c0_4] : memref<2x4x256xf32, #tpu.memory_space<vmem>>, vector<2x4x256xf32>
    %cst_5 = arith.constant dense<0xFF800000> : vector<2x256xf32>
    %3 = vector.multi_reduction <maximumf>, %2, %cst_5 [1] : vector<2x4x256xf32> to vector<2x256xf32>
    %4 = arith.maximumf %1, %3 : vector<2x256xf32>
    %5 = tpu.iota {dimensions = array<i32: 1>} : vector<1x256xi32>
    %c15_i32 = arith.constant 15 : i32
    %6 = vector.broadcast %c15_i32 : i32 to vector<1x256xi32>
    %7 = arith.andi %5, %6 : vector<1x256xi32>
    %c0_6 = arith.constant 0 : index
    %8 = memref.load %arg1[%c0_6] : memref<49xf32, #tpu.memory_space<smem>>
    %c1 = arith.constant 1 : index
    %9 = memref.load %arg1[%c1] : memref<49xf32, #tpu.memory_space<smem>>
    %c2 = arith.constant 2 : index
    %10 = memref.load %arg1[%c2] : memref<49xf32, #tpu.memory_space<smem>>
    %c3 = arith.constant 3 : index
    %11 = memref.load %arg1[%c3] : memref<49xf32, #tpu.memory_space<smem>>
    %c4 = arith.constant 4 : index
    %12 = memref.load %arg1[%c4] : memref<49xf32, #tpu.memory_space<smem>>
    %c5 = arith.constant 5 : index
    %13 = memref.load %arg1[%c5] : memref<49xf32, #tpu.memory_space<smem>>
    %c6 = arith.constant 6 : index
    %14 = memref.load %arg1[%c6] : memref<49xf32, #tpu.memory_space<smem>>
    %c7 = arith.constant 7 : index
    %15 = memref.load %arg1[%c7] : memref<49xf32, #tpu.memory_space<smem>>
    %c8 = arith.constant 8 : index
    %16 = memref.load %arg1[%c8] : memref<49xf32, #tpu.memory_space<smem>>
    %c9 = arith.constant 9 : index
    %17 = memref.load %arg1[%c9] : memref<49xf32, #tpu.memory_space<smem>>
    %c10 = arith.constant 10 : index
    %18 = memref.load %arg1[%c10] : memref<49xf32, #tpu.memory_space<smem>>
    %c11 = arith.constant 11 : index
    %19 = memref.load %arg1[%c11] : memref<49xf32, #tpu.memory_space<smem>>
    %c12 = arith.constant 12 : index
    %20 = memref.load %arg1[%c12] : memref<49xf32, #tpu.memory_space<smem>>
    %c13 = arith.constant 13 : index
    %21 = memref.load %arg1[%c13] : memref<49xf32, #tpu.memory_space<smem>>
    %c14 = arith.constant 14 : index
    %22 = memref.load %arg1[%c14] : memref<49xf32, #tpu.memory_space<smem>>
    %c15 = arith.constant 15 : index
    %23 = memref.load %arg1[%c15] : memref<49xf32, #tpu.memory_space<smem>>
    %c16 = arith.constant 16 : index
    %24 = memref.load %arg1[%c16] : memref<49xf32, #tpu.memory_space<smem>>
    %c17 = arith.constant 17 : index
    %25 = memref.load %arg1[%c17] : memref<49xf32, #tpu.memory_space<smem>>
    %c18 = arith.constant 18 : index
    %26 = memref.load %arg1[%c18] : memref<49xf32, #tpu.memory_space<smem>>
    %c19 = arith.constant 19 : index
    %27 = memref.load %arg1[%c19] : memref<49xf32, #tpu.memory_space<smem>>
    %c20 = arith.constant 20 : index
    %28 = memref.load %arg1[%c20] : memref<49xf32, #tpu.memory_space<smem>>
    %c21 = arith.constant 21 : index
    %29 = memref.load %arg1[%c21] : memref<49xf32, #tpu.memory_space<smem>>
    %c22 = arith.constant 22 : index
    %30 = memref.load %arg1[%c22] : memref<49xf32, #tpu.memory_space<smem>>
    %c23 = arith.constant 23 : index
    %31 = memref.load %arg1[%c23] : memref<49xf32, #tpu.memory_space<smem>>
    %c24 = arith.constant 24 : index
    %32 = memref.load %arg1[%c24] : memref<49xf32, #tpu.memory_space<smem>>
    %c25 = arith.constant 25 : index
    %33 = memref.load %arg1[%c25] : memref<49xf32, #tpu.memory_space<smem>>
    %c26 = arith.constant 26 : index
    %34 = memref.load %arg1[%c26] : memref<49xf32, #tpu.memory_space<smem>>
    %c27 = arith.constant 27 : index
    %35 = memref.load %arg1[%c27] : memref<49xf32, #tpu.memory_space<smem>>
    %c28 = arith.constant 28 : index
    %36 = memref.load %arg1[%c28] : memref<49xf32, #tpu.memory_space<smem>>
    %c29 = arith.constant 29 : index
    %37 = memref.load %arg1[%c29] : memref<49xf32, #tpu.memory_space<smem>>
    %c30 = arith.constant 30 : index
    %38 = memref.load %arg1[%c30] : memref<49xf32, #tpu.memory_space<smem>>
    %c31 = arith.constant 31 : index
    %39 = memref.load %arg1[%c31] : memref<49xf32, #tpu.memory_space<smem>>
    %c32 = arith.constant 32 : index
    %40 = memref.load %arg1[%c32] : memref<49xf32, #tpu.memory_space<smem>>
    %c33 = arith.constant 33 : index
    %41 = memref.load %arg1[%c33] : memref<49xf32, #tpu.memory_space<smem>>
    %c34 = arith.constant 34 : index
    %42 = memref.load %arg1[%c34] : memref<49xf32, #tpu.memory_space<smem>>
    %c35 = arith.constant 35 : index
    %43 = memref.load %arg1[%c35] : memref<49xf32, #tpu.memory_space<smem>>
    %c36 = arith.constant 36 : index
    %44 = memref.load %arg1[%c36] : memref<49xf32, #tpu.memory_space<smem>>
    %c37 = arith.constant 37 : index
    %45 = memref.load %arg1[%c37] : memref<49xf32, #tpu.memory_space<smem>>
    %c38 = arith.constant 38 : index
    %46 = memref.load %arg1[%c38] : memref<49xf32, #tpu.memory_space<smem>>
    %c39 = arith.constant 39 : index
    %47 = memref.load %arg1[%c39] : memref<49xf32, #tpu.memory_space<smem>>
    %c40 = arith.constant 40 : index
    %48 = memref.load %arg1[%c40] : memref<49xf32, #tpu.memory_space<smem>>
    %c41 = arith.constant 41 : index
    %49 = memref.load %arg1[%c41] : memref<49xf32, #tpu.memory_space<smem>>
    %c42 = arith.constant 42 : index
    %50 = memref.load %arg1[%c42] : memref<49xf32, #tpu.memory_space<smem>>
    %c43 = arith.constant 43 : index
    %51 = memref.load %arg1[%c43] : memref<49xf32, #tpu.memory_space<smem>>
    %c44 = arith.constant 44 : index
    %52 = memref.load %arg1[%c44] : memref<49xf32, #tpu.memory_space<smem>>
    %c45 = arith.constant 45 : index
    %53 = memref.load %arg1[%c45] : memref<49xf32, #tpu.memory_space<smem>>
    %c46 = arith.constant 46 : index
    %54 = memref.load %arg1[%c46] : memref<49xf32, #tpu.memory_space<smem>>
    %c47 = arith.constant 47 : index
    %55 = memref.load %arg1[%c47] : memref<49xf32, #tpu.memory_space<smem>>
    %c48 = arith.constant 48 : index
    %56 = memref.load %arg1[%c48] : memref<49xf32, #tpu.memory_space<smem>>
    %c0_7 = arith.constant 0 : index
    %57 = memref.load %arg2[%c0_7] : memref<1xf32, #tpu.memory_space<smem>>
    %c48_i32 = arith.constant 48 : i32
    %58 = vector.broadcast %c48_i32 : i32 to vector<1x256xi32>
    %59 = arith.cmpi sge, %5, %58 : vector<1x256xi32>
    %c256_i32 = arith.constant 256 : i32
    %60 = vector.broadcast %c256_i32 : i32 to vector<1x256xi32>
    %61 = arith.cmpi slt, %5, %60 : vector<1x256xi32>
    %62 = arith.andi %59, %61 : vector<1x256xi1>
    %c3_i32 = arith.constant 3 : i32
    %63 = vector.broadcast %c3_i32 : i32 to vector<1x256xi32>
    %64 = arith.cmpi sge, %7, %63 : vector<1x256xi32>
    %c16_i32 = arith.constant 16 : i32
    %65 = vector.broadcast %c16_i32 : i32 to vector<1x256xi32>
    %66 = arith.cmpi slt, %7, %65 : vector<1x256xi32>
    %67 = arith.andi %64, %66 : vector<1x256xi1>
    %c32_i32 = arith.constant 32 : i32
    %68 = vector.broadcast %c32_i32 : i32 to vector<1x256xi32>
    %69 = arith.cmpi sge, %5, %68 : vector<1x256xi32>
    %c256_i32_8 = arith.constant 256 : i32
    %70 = vector.broadcast %c256_i32_8 : i32 to vector<1x256xi32>
    %71 = arith.cmpi slt, %5, %70 : vector<1x256xi32>
    %72 = arith.andi %69, %71 : vector<1x256xi1>
    %c2_i32 = arith.constant 2 : i32
    %73 = vector.broadcast %c2_i32 : i32 to vector<1x256xi32>
    %74 = arith.cmpi sge, %7, %73 : vector<1x256xi32>
    %c16_i32_9 = arith.constant 16 : i32
    %75 = vector.broadcast %c16_i32_9 : i32 to vector<1x256xi32>
    %76 = arith.cmpi slt, %7, %75 : vector<1x256xi32>
    %77 = arith.andi %74, %76 : vector<1x256xi1>
    %c16_i32_10 = arith.constant 16 : i32
    %78 = vector.broadcast %c16_i32_10 : i32 to vector<1x256xi32>
    %79 = arith.cmpi sge, %5, %78 : vector<1x256xi32>
    %c256_i32_11 = arith.constant 256 : i32
    %80 = vector.broadcast %c256_i32_11 : i32 to vector<1x256xi32>
    %81 = arith.cmpi slt, %5, %80 : vector<1x256xi32>
    %82 = arith.andi %79, %81 : vector<1x256xi1>
    %c1_i32 = arith.constant 1 : i32
    %83 = vector.broadcast %c1_i32 : i32 to vector<1x256xi32>
    %84 = arith.cmpi sge, %7, %83 : vector<1x256xi32>
    %c16_i32_12 = arith.constant 16 : i32
    %85 = vector.broadcast %c16_i32_12 : i32 to vector<1x256xi32>
    %86 = arith.cmpi slt, %7, %85 : vector<1x256xi32>
    %87 = arith.andi %84, %86 : vector<1x256xi1>
    %c0_i32 = arith.constant 0 : i32
    %88 = vector.broadcast %c0_i32 : i32 to vector<1x256xi32>
    %89 = arith.cmpi sge, %5, %88 : vector<1x256xi32>
    %c240_i32 = arith.constant 240 : i32
    %90 = vector.broadcast %c240_i32 : i32 to vector<1x256xi32>
    %91 = arith.cmpi slt, %5, %90 : vector<1x256xi32>
    %92 = arith.andi %89, %91 : vector<1x256xi1>
    %c0_i32_13 = arith.constant 0 : i32
    %93 = vector.broadcast %c0_i32_13 : i32 to vector<1x256xi32>
    %94 = arith.cmpi sge, %7, %93 : vector<1x256xi32>
    %c15_i32_14 = arith.constant 15 : i32
    %95 = vector.broadcast %c15_i32_14 : i32 to vector<1x256xi32>
    %96 = arith.cmpi slt, %7, %95 : vector<1x256xi32>
    %97 = arith.andi %94, %96 : vector<1x256xi1>
    %c0_i32_15 = arith.constant 0 : i32
    %98 = vector.broadcast %c0_i32_15 : i32 to vector<1x256xi32>
    %99 = arith.cmpi sge, %5, %98 : vector<1x256xi32>
    %c224_i32 = arith.constant 224 : i32
    %100 = vector.broadcast %c224_i32 : i32 to vector<1x256xi32>
    %101 = arith.cmpi slt, %5, %100 : vector<1x256xi32>
    %102 = arith.andi %99, %101 : vector<1x256xi1>
    %c0_i32_16 = arith.constant 0 : i32
    %103 = vector.broadcast %c0_i32_16 : i32 to vector<1x256xi32>
    %104 = arith.cmpi sge, %7, %103 : vector<1x256xi32>
    %c14_i32 = arith.constant 14 : i32
    %105 = vector.broadcast %c14_i32 : i32 to vector<1x256xi32>
    %106 = arith.cmpi slt, %7, %105 : vector<1x256xi32>
    %107 = arith.andi %104, %106 : vector<1x256xi1>
    %c0_i32_17 = arith.constant 0 : i32
    %108 = vector.broadcast %c0_i32_17 : i32 to vector<1x256xi32>
    %109 = arith.cmpi sge, %5, %108 : vector<1x256xi32>
    %c208_i32 = arith.constant 208 : i32
    %110 = vector.broadcast %c208_i32 : i32 to vector<1x256xi32>
    %111 = arith.cmpi slt, %5, %110 : vector<1x256xi32>
    %112 = arith.andi %109, %111 : vector<1x256xi1>
    %c0_i32_18 = arith.constant 0 : i32
    %113 = vector.broadcast %c0_i32_18 : i32 to vector<1x256xi32>
    %114 = arith.cmpi sge, %7, %113 : vector<1x256xi32>
    %c13_i32 = arith.constant 13 : i32
    %115 = vector.broadcast %c13_i32 : i32 to vector<1x256xi32>
    %116 = arith.cmpi slt, %7, %115 : vector<1x256xi32>
    %117 = arith.andi %114, %116 : vector<1x256xi1>
    %c3_i32_19 = arith.constant 3 : i32
    %118 = tpu.dynamic_rotate %4 by %c3_i32_19 dim 1 : vector<2x256xf32>, i32 -> vector<2x256xf32>
    %cst_20 = arith.constant 0.000000e+00 : f32
    %119 = vector.shape_cast %67 : vector<1x256xi1> to vector<1x256xi1>
    %120 = vector.broadcast %119 : vector<1x256xi1> to vector<2x256xi1>
    %121 = vector.broadcast %cst_20 : f32 to vector<2x256xf32>
    %122 = arith.select %120, %118, %121 : vector<2x256xi1>, vector<2x256xf32>
    %c2_i32_21 = arith.constant 2 : i32
    %123 = tpu.dynamic_rotate %4 by %c2_i32_21 dim 1 : vector<2x256xf32>, i32 -> vector<2x256xf32>
    %cst_22 = arith.constant 0.000000e+00 : f32
    %124 = vector.shape_cast %77 : vector<1x256xi1> to vector<1x256xi1>
    %125 = vector.broadcast %124 : vector<1x256xi1> to vector<2x256xi1>
    %126 = vector.broadcast %cst_22 : f32 to vector<2x256xf32>
    %127 = arith.select %125, %123, %126 : vector<2x256xi1>, vector<2x256xf32>
    %c1_i32_23 = arith.constant 1 : i32
    %128 = tpu.dynamic_rotate %4 by %c1_i32_23 dim 1 : vector<2x256xf32>, i32 -> vector<2x256xf32>
    %cst_24 = arith.constant 0.000000e+00 : f32
    %129 = vector.shape_cast %87 : vector<1x256xi1> to vector<1x256xi1>
    %130 = vector.broadcast %129 : vector<1x256xi1> to vector<2x256xi1>
    %131 = vector.broadcast %cst_24 : f32 to vector<2x256xf32>
    %132 = arith.select %130, %128, %131 : vector<2x256xi1>, vector<2x256xf32>
    %c255_i32 = arith.constant 255 : i32
    %133 = tpu.dynamic_rotate %4 by %c255_i32 dim 1 : vector<2x256xf32>, i32 -> vector<2x256xf32>
    %cst_25 = arith.constant 0.000000e+00 : f32
    %134 = vector.shape_cast %97 : vector<1x256xi1> to vector<1x256xi1>
    %135 = vector.broadcast %134 : vector<1x256xi1> to vector<2x256xi1>
    %136 = vector.broadcast %cst_25 : f32 to vector<2x256xf32>
    %137 = arith.select %135, %133, %136 : vector<2x256xi1>, vector<2x256xf32>
    %c254_i32 = arith.constant 254 : i32
    %138 = tpu.dynamic_rotate %4 by %c254_i32 dim 1 : vector<2x256xf32>, i32 -> vector<2x256xf32>
    %cst_26 = arith.constant 0.000000e+00 : f32
    %139 = vector.shape_cast %107 : vector<1x256xi1> to vector<1x256xi1>
    %140 = vector.broadcast %139 : vector<1x256xi1> to vector<2x256xi1>
    %141 = vector.broadcast %cst_26 : f32 to vector<2x256xf32>
    %142 = arith.select %140, %138, %141 : vector<2x256xi1>, vector<2x256xf32>
    %c253_i32 = arith.constant 253 : i32
    %143 = tpu.dynamic_rotate %4 by %c253_i32 dim 1 : vector<2x256xf32>, i32 -> vector<2x256xf32>
    %cst_27 = arith.constant 0.000000e+00 : f32
    %144 = vector.shape_cast %117 : vector<1x256xi1> to vector<1x256xi1>
    %145 = vector.broadcast %144 : vector<1x256xi1> to vector<2x256xi1>
    %146 = vector.broadcast %cst_27 : f32 to vector<2x256xf32>
    %147 = arith.select %145, %143, %146 : vector<2x256xi1>, vector<2x256xf32>
    %148 = vector.broadcast %57 : f32 to vector<2x256xf32>
    %149 = vector.broadcast %8 : f32 to vector<2x256xf32>
    %150 = arith.mulf %122, %149 : vector<2x256xf32>
    %151 = vector.broadcast %9 : f32 to vector<2x256xf32>
    %152 = arith.mulf %127, %151 : vector<2x256xf32>
    %153 = arith.addf %150, %152 : vector<2x256xf32>
    %154 = vector.broadcast %10 : f32 to vector<2x256xf32>
    %155 = arith.mulf %132, %154 : vector<2x256xf32>
    %156 = arith.addf %153, %155 : vector<2x256xf32>
    %157 = vector.broadcast %11 : f32 to vector<2x256xf32>
    %158 = arith.mulf %4, %157 : vector<2x256xf32>
    %159 = arith.addf %156, %158 : vector<2x256xf32>
    %160 = vector.broadcast %12 : f32 to vector<2x256xf32>
    %161 = arith.mulf %137, %160 : vector<2x256xf32>
    %162 = arith.addf %159, %161 : vector<2x256xf32>
    %163 = vector.broadcast %13 : f32 to vector<2x256xf32>
    %164 = arith.mulf %142, %163 : vector<2x256xf32>
    %165 = arith.addf %162, %164 : vector<2x256xf32>
    %166 = vector.broadcast %14 : f32 to vector<2x256xf32>
    %167 = arith.mulf %147, %166 : vector<2x256xf32>
    %168 = arith.addf %165, %167 : vector<2x256xf32>
    %c48_i32_28 = arith.constant 48 : i32
    %169 = tpu.dynamic_rotate %168 by %c48_i32_28 dim 1 : vector<2x256xf32>, i32 -> vector<2x256xf32>
    %cst_29 = arith.constant 0.000000e+00 : f32
    %170 = vector.shape_cast %62 : vector<1x256xi1> to vector<1x256xi1>
    %171 = vector.broadcast %170 : vector<1x256xi1> to vector<2x256xi1>
    %172 = vector.broadcast %cst_29 : f32 to vector<2x256xf32>
    %173 = arith.select %171, %169, %172 : vector<2x256xi1>, vector<2x256xf32>
    %174 = arith.addf %148, %173 : vector<2x256xf32>
    %175 = vector.broadcast %15 : f32 to vector<2x256xf32>
    %176 = arith.mulf %122, %175 : vector<2x256xf32>
    %177 = vector.broadcast %16 : f32 to vector<2x256xf32>
    %178 = arith.mulf %127, %177 : vector<2x256xf32>
    %179 = arith.addf %176, %178 : vector<2x256xf32>
    %180 = vector.broadcast %17 : f32 to vector<2x256xf32>
    %181 = arith.mulf %132, %180 : vector<2x256xf32>
    %182 = arith.addf %179, %181 : vector<2x256xf32>
    %183 = vector.broadcast %18 : f32 to vector<2x256xf32>
    %184 = arith.mulf %4, %183 : vector<2x256xf32>
    %185 = arith.addf %182, %184 : vector<2x256xf32>
    %186 = vector.broadcast %19 : f32 to vector<2x256xf32>
    %187 = arith.mulf %137, %186 : vector<2x256xf32>
    %188 = arith.addf %185, %187 : vector<2x256xf32>
    %189 = vector.broadcast %20 : f32 to vector<2x256xf32>
    %190 = arith.mulf %142, %189 : vector<2x256xf32>
    %191 = arith.addf %188, %190 : vector<2x256xf32>
    %192 = vector.broadcast %21 : f32 to vector<2x256xf32>
    %193 = arith.mulf %147, %192 : vector<2x256xf32>
    %194 = arith.addf %191, %193 : vector<2x256xf32>
    %c32_i32_30 = arith.constant 32 : i32
    %195 = tpu.dynamic_rotate %194 by %c32_i32_30 dim 1 : vector<2x256xf32>, i32 -> vector<2x256xf32>
    %cst_31 = arith.constant 0.000000e+00 : f32
    %196 = vector.shape_cast %72 : vector<1x256xi1> to vector<1x256xi1>
    %197 = vector.broadcast %196 : vector<1x256xi1> to vector<2x256xi1>
    %198 = vector.broadcast %cst_31 : f32 to vector<2x256xf32>
    %199 = arith.select %197, %195, %198 : vector<2x256xi1>, vector<2x256xf32>
    %200 = arith.addf %174, %199 : vector<2x256xf32>
    %201 = vector.broadcast %22 : f32 to vector<2x256xf32>
    %202 = arith.mulf %122, %201 : vector<2x256xf32>
    %203 = vector.broadcast %23 : f32 to vector<2x256xf32>
    %204 = arith.mulf %127, %203 : vector<2x256xf32>
    %205 = arith.addf %202, %204 : vector<2x256xf32>
    %206 = vector.broadcast %24 : f32 to vector<2x256xf32>
    %207 = arith.mulf %132, %206 : vector<2x256xf32>
    %208 = arith.addf %205, %207 : vector<2x256xf32>
    %209 = vector.broadcast %25 : f32 to vector<2x256xf32>
    %210 = arith.mulf %4, %209 : vector<2x256xf32>
    %211 = arith.addf %208, %210 : vector<2x256xf32>
    %212 = vector.broadcast %26 : f32 to vector<2x256xf32>
    %213 = arith.mulf %137, %212 : vector<2x256xf32>
    %214 = arith.addf %211, %213 : vector<2x256xf32>
    %215 = vector.broadcast %27 : f32 to vector<2x256xf32>
    %216 = arith.mulf %142, %215 : vector<2x256xf32>
    %217 = arith.addf %214, %216 : vector<2x256xf32>
    %218 = vector.broadcast %28 : f32 to vector<2x256xf32>
    %219 = arith.mulf %147, %218 : vector<2x256xf32>
    %220 = arith.addf %217, %219 : vector<2x256xf32>
    %c16_i32_32 = arith.constant 16 : i32
    %221 = tpu.dynamic_rotate %220 by %c16_i32_32 dim 1 : vector<2x256xf32>, i32 -> vector<2x256xf32>
    %cst_33 = arith.constant 0.000000e+00 : f32
    %222 = vector.shape_cast %82 : vector<1x256xi1> to vector<1x256xi1>
    %223 = vector.broadcast %222 : vector<1x256xi1> to vector<2x256xi1>
    %224 = vector.broadcast %cst_33 : f32 to vector<2x256xf32>
    %225 = arith.select %223, %221, %224 : vector<2x256xi1>, vector<2x256xf32>
    %226 = arith.addf %200, %225 : vector<2x256xf32>
    %227 = vector.broadcast %29 : f32 to vector<2x256xf32>
    %228 = arith.mulf %122, %227 : vector<2x256xf32>
    %229 = vector.broadcast %30 : f32 to vector<2x256xf32>
    %230 = arith.mulf %127, %229 : vector<2x256xf32>
    %231 = arith.addf %228, %230 : vector<2x256xf32>
    %232 = vector.broadcast %31 : f32 to vector<2x256xf32>
    %233 = arith.mulf %132, %232 : vector<2x256xf32>
    %234 = arith.addf %231, %233 : vector<2x256xf32>
    %235 = vector.broadcast %32 : f32 to vector<2x256xf32>
    %236 = arith.mulf %4, %235 : vector<2x256xf32>
    %237 = arith.addf %234, %236 : vector<2x256xf32>
    %238 = vector.broadcast %33 : f32 to vector<2x256xf32>
    %239 = arith.mulf %137, %238 : vector<2x256xf32>
    %240 = arith.addf %237, %239 : vector<2x256xf32>
    %241 = vector.broadcast %34 : f32 to vector<2x256xf32>
    %242 = arith.mulf %142, %241 : vector<2x256xf32>
    %243 = arith.addf %240, %242 : vector<2x256xf32>
    %244 = vector.broadcast %35 : f32 to vector<2x256xf32>
    %245 = arith.mulf %147, %244 : vector<2x256xf32>
    %246 = arith.addf %243, %245 : vector<2x256xf32>
    %247 = arith.addf %226, %246 : vector<2x256xf32>
    %248 = vector.broadcast %36 : f32 to vector<2x256xf32>
    %249 = arith.mulf %122, %248 : vector<2x256xf32>
    %250 = vector.broadcast %37 : f32 to vector<2x256xf32>
    %251 = arith.mulf %127, %250 : vector<2x256xf32>
    %252 = arith.addf %249, %251 : vector<2x256xf32>
    %253 = vector.broadcast %38 : f32 to vector<2x256xf32>
    %254 = arith.mulf %132, %253 : vector<2x256xf32>
    %255 = arith.addf %252, %254 : vector<2x256xf32>
    %256 = vector.broadcast %39 : f32 to vector<2x256xf32>
    %257 = arith.mulf %4, %256 : vector<2x256xf32>
    %258 = arith.addf %255, %257 : vector<2x256xf32>
    %259 = vector.broadcast %40 : f32 to vector<2x256xf32>
    %260 = arith.mulf %137, %259 : vector<2x256xf32>
    %261 = arith.addf %258, %260 : vector<2x256xf32>
    %262 = vector.broadcast %41 : f32 to vector<2x256xf32>
    %263 = arith.mulf %142, %262 : vector<2x256xf32>
    %264 = arith.addf %261, %263 : vector<2x256xf32>
    %265 = vector.broadcast %42 : f32 to vector<2x256xf32>
    %266 = arith.mulf %147, %265 : vector<2x256xf32>
    %267 = arith.addf %264, %266 : vector<2x256xf32>
    %c240_i32_34 = arith.constant 240 : i32
    %268 = tpu.dynamic_rotate %267 by %c240_i32_34 dim 1 : vector<2x256xf32>, i32 -> vector<2x256xf32>
    %cst_35 = arith.constant 0.000000e+00 : f32
    %269 = vector.shape_cast %92 : vector<1x256xi1> to vector<1x256xi1>
    %270 = vector.broadcast %269 : vector<1x256xi1> to vector<2x256xi1>
    %271 = vector.broadcast %cst_35 : f32 to vector<2x256xf32>
    %272 = arith.select %270, %268, %271 : vector<2x256xi1>, vector<2x256xf32>
    %273 = arith.addf %247, %272 : vector<2x256xf32>
    %274 = vector.broadcast %43 : f32 to vector<2x256xf32>
    %275 = arith.mulf %122, %274 : vector<2x256xf32>
    %276 = vector.broadcast %44 : f32 to vector<2x256xf32>
    %277 = arith.mulf %127, %276 : vector<2x256xf32>
    %278 = arith.addf %275, %277 : vector<2x256xf32>
    %279 = vector.broadcast %45 : f32 to vector<2x256xf32>
    %280 = arith.mulf %132, %279 : vector<2x256xf32>
    %281 = arith.addf %278, %280 : vector<2x256xf32>
    %282 = vector.broadcast %46 : f32 to vector<2x256xf32>
    %283 = arith.mulf %4, %282 : vector<2x256xf32>
    %284 = arith.addf %281, %283 : vector<2x256xf32>
    %285 = vector.broadcast %47 : f32 to vector<2x256xf32>
    %286 = arith.mulf %137, %285 : vector<2x256xf32>
    %287 = arith.addf %284, %286 : vector<2x256xf32>
    %288 = vector.broadcast %48 : f32 to vector<2x256xf32>
    %289 = arith.mulf %142, %288 : vector<2x256xf32>
    %290 = arith.addf %287, %289 : vector<2x256xf32>
    %291 = vector.broadcast %49 : f32 to vector<2x256xf32>
    %292 = arith.mulf %147, %291 : vector<2x256xf32>
    %293 = arith.addf %290, %292 : vector<2x256xf32>
    %c224_i32_36 = arith.constant 224 : i32
    %294 = tpu.dynamic_rotate %293 by %c224_i32_36 dim 1 : vector<2x256xf32>, i32 -> vector<2x256xf32>
    %cst_37 = arith.constant 0.000000e+00 : f32
    %295 = vector.shape_cast %102 : vector<1x256xi1> to vector<1x256xi1>
    %296 = vector.broadcast %295 : vector<1x256xi1> to vector<2x256xi1>
    %297 = vector.broadcast %cst_37 : f32 to vector<2x256xf32>
    %298 = arith.select %296, %294, %297 : vector<2x256xi1>, vector<2x256xf32>
    %299 = arith.addf %273, %298 : vector<2x256xf32>
    %300 = vector.broadcast %50 : f32 to vector<2x256xf32>
    %301 = arith.mulf %122, %300 : vector<2x256xf32>
    %302 = vector.broadcast %51 : f32 to vector<2x256xf32>
    %303 = arith.mulf %127, %302 : vector<2x256xf32>
    %304 = arith.addf %301, %303 : vector<2x256xf32>
    %305 = vector.broadcast %52 : f32 to vector<2x256xf32>
    %306 = arith.mulf %132, %305 : vector<2x256xf32>
    %307 = arith.addf %304, %306 : vector<2x256xf32>
    %308 = vector.broadcast %53 : f32 to vector<2x256xf32>
    %309 = arith.mulf %4, %308 : vector<2x256xf32>
    %310 = arith.addf %307, %309 : vector<2x256xf32>
    %311 = vector.broadcast %54 : f32 to vector<2x256xf32>
    %312 = arith.mulf %137, %311 : vector<2x256xf32>
    %313 = arith.addf %310, %312 : vector<2x256xf32>
    %314 = vector.broadcast %55 : f32 to vector<2x256xf32>
    %315 = arith.mulf %142, %314 : vector<2x256xf32>
    %316 = arith.addf %313, %315 : vector<2x256xf32>
    %317 = vector.broadcast %56 : f32 to vector<2x256xf32>
    %318 = arith.mulf %147, %317 : vector<2x256xf32>
    %319 = arith.addf %316, %318 : vector<2x256xf32>
    %c208_i32_38 = arith.constant 208 : i32
    %320 = tpu.dynamic_rotate %319 by %c208_i32_38 dim 1 : vector<2x256xf32>, i32 -> vector<2x256xf32>
    %cst_39 = arith.constant 0.000000e+00 : f32
    %321 = vector.shape_cast %112 : vector<1x256xi1> to vector<1x256xi1>
    %322 = vector.broadcast %321 : vector<1x256xi1> to vector<2x256xi1>
    %323 = vector.broadcast %cst_39 : f32 to vector<2x256xf32>
    %324 = arith.select %322, %320, %323 : vector<2x256xi1>, vector<2x256xf32>
    %325 = arith.addf %299, %324 : vector<2x256xf32>
    %326 = arith.negf %325 : vector<2x256xf32>
    %327 = math.exp %326 : vector<2x256xf32>
    %cst_40 = arith.constant 1.000000e+00 : f32
    %328 = vector.broadcast %cst_40 : f32 to vector<2x256xf32>
    %329 = arith.addf %328, %327 : vector<2x256xf32>
    %330 = arith.divf %328, %329 : vector<2x256xf32>
    %331 = vector.shape_cast %330 : vector<2x256xf32> to vector<2x1x256xf32>
    %cst_41 = arith.constant 1.000000e+00 : f32
    %332 = vector.broadcast %cst_41 : f32 to vector<2x256xf32>
    %333 = arith.subf %332, %330 : vector<2x256xf32>
    %334 = vector.shape_cast %333 : vector<2x256xf32> to vector<2x1x256xf32>
    %c0_42 = arith.constant 0 : index
    %c0_43 = arith.constant 0 : index
    %c0_44 = arith.constant 0 : index
    %335 = vector.load %arg3[%c0_42, %c0_43, %c0_44] : memref<2x4x256xf32, #tpu.memory_space<vmem>>, vector<2x4x256xf32>
    %336 = vector.broadcast %331 : vector<2x1x256xf32> to vector<2x4x256xf32>
    %337 = arith.mulf %335, %336 : vector<2x4x256xf32>
    %c0_45 = arith.constant 0 : index
    %c0_46 = arith.constant 0 : index
    %c0_47 = arith.constant 0 : index
    %338 = vector.load %arg5[%c0_45, %c0_46, %c0_47] : memref<2x4x256xf32, #tpu.memory_space<vmem>>, vector<2x4x256xf32>
    tpu.vector_store %arg5[%c0_45, %c0_46, %c0_47], %337 {strides = array<i32>} : memref<2x4x256xf32, #tpu.memory_space<vmem>>, vector<2x4x256xf32>,
    %c0_48 = arith.constant 0 : index
    %c0_49 = arith.constant 0 : index
    %c0_50 = arith.constant 0 : index
    %339 = vector.load %arg4[%c0_48, %c0_49, %c0_50] : memref<2x4x256xf32, #tpu.memory_space<vmem>>, vector<2x4x256xf32>
    %340 = vector.broadcast %334 : vector<2x1x256xf32> to vector<2x4x256xf32>
    %341 = arith.mulf %339, %340 : vector<2x4x256xf32>
    %c0_51 = arith.constant 0 : index
    %c0_52 = arith.constant 0 : index
    %c0_53 = arith.constant 0 : index
    %342 = vector.load %arg6[%c0_51, %c0_52, %c0_53] : memref<2x4x256xf32, #tpu.memory_space<vmem>>, vector<2x4x256xf32>
    tpu.vector_store %arg6[%c0_51, %c0_52, %c0_53], %341 {strides = array<i32>} : memref<2x4x256xf32, #tpu.memory_space<vmem>>, vector<2x4x256xf32>,
    return
  }
  func.func @transform_0(%arg0: i32) -> i32 {
    %c0_i32 = arith.constant 0 : i32
    %c0_i32_0 = arith.constant 0 : i32
    return %c0_i32 : i32
  }
  func.func @transform_1(%arg0: i32) -> i32 {
    %c0_i32 = arith.constant 0 : i32
    %c0_i32_0 = arith.constant 0 : i32
    return %c0_i32 : i32
  }
  func.func @transform_2(%arg0: i32) -> (i32, i32, i32) {
    %c0_i32 = arith.constant 0 : i32
    %c0_i32_0 = arith.constant 0 : i32
    %c0_i32_1 = arith.constant 0 : i32
    return %arg0, %c0_i32, %c0_i32_0 : i32, i32, i32
  }
  func.func @transform_3(%arg0: i32) -> (i32, i32, i32) {
    %c0_i32 = arith.constant 0 : i32
    %c0_i32_0 = arith.constant 0 : i32
    %c0_i32_1 = arith.constant 0 : i32
    return %arg0, %c0_i32, %c0_i32_0 : i32, i32, i32
  }
  func.func @transform_4(%arg0: i32) -> (i32, i32, i32) {
    %c0_i32 = arith.constant 0 : i32
    %c0_i32_0 = arith.constant 0 : i32
    %c0_i32_1 = arith.constant 0 : i32
    return %arg0, %c0_i32, %c0_i32_0 : i32, i32, i32
  }
  func.func @transform_5(%arg0: i32) -> (i32, i32, i32) {
    %c0_i32 = arith.constant 0 : i32
    %c0_i32_0 = arith.constant 0 : i32
    %c0_i32_1 = arith.constant 0 : i32
    return %arg0, %c0_i32, %c0_i32_0 : i32, i32, i32
  }
}

</mosaic_0001>

<llo_original>
// kernel: sam_forward.1
$region0: #{sam_forward.1}
  #allocation0 [shape = 'u32[]', space=smem, size = 0x4, offset = 0x4, fixed_abs, tag = 'smem constant byte address 0x4 - core index']
  #allocation1 [shape = 'u32[144,128]{1,0:T(1,128)}', space=vmem, size = 0x12000, scoped, tag = 'internal scratch']
  #allocation2 [shape = 'f32[1]{0:T(128)S(6)}', space=smem, size = 0x200, scoped, tag = 'scoped memory for sam_forward.1']
  %s0 = inlined_call_operand.vmem [shape: f32[49], index: 0, kind: input, shape index: {}]
  %s1 = inlined_call_operand.<no memory space> [shape: f32[1], index: 1, kind: input, shape index: {}]
  %s2 = inlined_call_operand.vmem [shape: f32[2,4,256], index: 2, kind: input, shape index: {}]
  %s3 = inlined_call_operand.vmem [shape: f32[2,4,256], index: 3, kind: input, shape index: {}]
  %s4 = inlined_call_operand.vmem [shape: f32[2,4,256], index: 4, kind: output, shape index: {0}]
  %s5 = inlined_call_operand.vmem [shape: f32[2,4,256], index: 5, kind: output, shape index: {1}]
  %6 = xla_tuple %s4, %s5
  %s7 = sld [smem:[#allocation0]]
  $region38: #{sam_forward.1} parent=0
    _
  %s9 = ssub.s32 1, %s7
  %s10 = scalar_select 0, %s9, %s7
  %11 = sst [smem:[#allocation2]] %s1
  $region1: #{sam_forward.1} parent=0
    #allocation3 [shape = 'u8[512]{0}', space=smem, size = 0x200, scoped, tag = 'input window, operand 0, single buffered']
    #allocation4 [shape = 's32[1]{0}', space=sflag, size = 0x4, scoped, tag = 'scoped memory for sam_forward.1']
    %12 = vsyncpa [#allocation4], 0
    // Predicated region
    $region2: #{sam_forward.1} parent=1 // pred_check
      _
    $region3: #{sam_forward.1} parent=1 // pred_check_branch
      %14 = sbr.rel (0) target = $region5
    $region4: #{sam_forward.1} parent=1 // pred_region
      %s16 = ssub.s32 16, 16
      %17 = vsyncadd [#allocation4], %s16
      %s19 = sshll.u32 %s0, 4
      %s20 = int_to_ptr.vmem [resolvable:$true] %s19
      %22 = dma.vmem_to_smem %s20, 16, [#allocation3], [#allocation4]
    $region5: #{sam_forward.1} parent=1 // pred_fallthru
      _
    // Predicated region
    $region6: #{sam_forward.1} parent=1 // pred_check
      _
    $region7: #{sam_forward.1} parent=1 // pred_check_branch
      %24 = sbr.rel (0) target = $region9
    $region8: #{sam_forward.1} parent=1 // pred_region
      _
    $region9: #{sam_forward.1} parent=1 // pred_fallthru
      _
    // Predicated region
    $region10: #{sam_forward.1} parent=1 // pred_check
      _
    $region11: #{sam_forward.1} parent=1 // pred_check_branch
      %26 = sbr.rel (0) target = $region13
    $region12: #{sam_forward.1} parent=1 // pred_region
      _
    $region13: #{sam_forward.1} parent=1 // pred_fallthru
      _
    // Predicated region
    $region14: #{sam_forward.1} parent=1 // pred_check
      _
    $region15: #{sam_forward.1} parent=1 // pred_check_branch
      %28 = sbr.rel (0) target = $region17
    $region16: #{sam_forward.1} parent=1 // pred_region
      _
    $region17: #{sam_forward.1} parent=1 // pred_fallthru
      _
    // Predicated region
    $region18: #{sam_forward.1} parent=1 // pred_check
      _
    $region19: #{sam_forward.1} parent=1 // pred_check_branch
      %30 = sbr.rel (0) target = $region21
    $region20: #{sam_forward.1} parent=1 // pred_region
      %31 = dma.done [#allocation4], 16
    $region21: #{sam_forward.1} parent=1 // pred_fallthru
      _
    %32 = sfence
    %v33 = vld [vmem:[%s2] sm:$0xff]
    %v34 = vld [vmem:[%s2 + $0x8] sm:$0xff]
    %v37 = vcombine.high %v33, %v33
    %v38 = vcombine.high %v34, %v34
    %vm41 = vcmask 1043456
    %v42 = vsel %vm41, %v33, -inf
    %v43 = vrot.slane %v42, 4
    %v44 = vmax.f32 %v42, %v43
    %v45 = vrot.slane %v44, 2
    %v46 = vmax.f32 %v44, %v45
    %v47 = vrot.slane %v46, 1
    %v48 = vmax.f32 %v46, %v47
    %v49 = vsel %vm41, %v37, -inf
    %v50 = vrot.slane %v49, 4
    %v51 = vmax.f32 %v49, %v50
    %v52 = vrot.slane %v51, 2
    %v53 = vmax.f32 %v51, %v52
    %v54 = vrot.slane %v53, 1
    %v55 = vmax.f32 %v53, %v54
    %v56 = vsel %vm41, %v34, -inf
    %v57 = vrot.slane %v56, 4
    %v58 = vmax.f32 %v56, %v57
    %v59 = vrot.slane %v58, 2
    %v60 = vmax.f32 %v58, %v59
    %v61 = vrot.slane %v60, 1
    %v62 = vmax.f32 %v60, %v61
    %v63 = vsel %vm41, %v38, -inf
    %v64 = vrot.slane %v63, 4
    %v65 = vmax.f32 %v63, %v64
    %v66 = vrot.slane %v65, 2
    %v67 = vmax.f32 %v65, %v66
    %v68 = vrot.slane %v67, 1
    %v69 = vmax.f32 %v67, %v68
    %v70 = vld [vmem:[%s3] sm:$0xff]
    %v71 = vld [vmem:[%s3 + $0x8] sm:$0xff]
    %v74 = vcombine.high %v70, %v70
    %v75 = vcombine.high %v71, %v71
    %v78 = vsel %vm41, %v70, -inf
    %v79 = vrot.slane %v78, 4
    %v80 = vmax.f32 %v78, %v79
    %v81 = vrot.slane %v80, 2
    %v82 = vmax.f32 %v80, %v81
    %v83 = vrot.slane %v82, 1
    %v84 = vmax.f32 %v82, %v83
    %v85 = vsel %vm41, %v74, -inf
    %v86 = vrot.slane %v85, 4
    %v87 = vmax.f32 %v85, %v86
    %v88 = vrot.slane %v87, 2
    %v89 = vmax.f32 %v87, %v88
    %v90 = vrot.slane %v89, 1
    %v91 = vmax.f32 %v89, %v90
    %v92 = vsel %vm41, %v71, -inf
    %v93 = vrot.slane %v92, 4
    %v94 = vmax.f32 %v92, %v93
    %v95 = vrot.slane %v94, 2
    %v96 = vmax.f32 %v94, %v95
    %v97 = vrot.slane %v96, 1
    %v98 = vmax.f32 %v96, %v97
    %v99 = vsel %vm41, %v75, -inf
    %v100 = vrot.slane %v99, 4
    %v101 = vmax.f32 %v99, %v100
    %v102 = vrot.slane %v101, 2
    %v103 = vmax.f32 %v101, %v102
    %v104 = vrot.slane %v103, 1
    %v105 = vmax.f32 %v103, %v104
    %v106 = vmax.f32 %v48, %v84
    %v107 = vmax.f32 %v55, %v91
    %v108 = vmax.f32 %v62, %v98
    %v109 = vmax.f32 %v69, %v105
    %v110 = vlaneseq
    %v111 = vand.u32 %v110, 127
    %v112 = vadd.s32 %v111, 128
    %v113 = vand.u32 %v111, 15
    %v114 = vand.u32 %v112, 15
    %s115 = sld [smem:[#allocation3]]
    %s116 = sld [smem:[#allocation3 + $0x1]]
    %s117 = sld [smem:[#allocation3 + $0x2]]
    %s118 = sld [smem:[#allocation3 + $0x3]]
    %s119 = sld [smem:[#allocation3 + $0x4]]
    %s120 = sld [smem:[#allocation3 + $0x5]]
    %s121 = sld [smem:[#allocation3 + $0x6]]
    %s122 = sld [smem:[#allocation3 + $0x7]]
    %s123 = sld [smem:[#allocation3 + $0x8]]
    %s124 = sld [smem:[#allocation3 + $0x9]]
    %s125 = sld [smem:[#allocation3 + $0xa]]
    %s126 = sld [smem:[#allocation3 + $0xb]]
    %s127 = sld [smem:[#allocation3 + $0xc]]
    %s128 = sld [smem:[#allocation3 + $0xd]]
    %s129 = sld [smem:[#allocation3 + $0xe]]
    %s130 = sld [smem:[#allocation3 + $0xf]]
    %s131 = sld [smem:[#allocation3 + $0x10]]
    %s132 = sld [smem:[#allocation3 + $0x11]]
    %s133 = sld [smem:[#allocation3 + $0x12]]
    %s134 = sld [smem:[#allocation3 + $0x13]]
    %s135 = sld [smem:[#allocation3 + $0x14]]
    %s136 = sld [smem:[#allocation3 + $0x15]]
    %s137 = sld [smem:[#allocation3 + $0x16]]
    %s138 = sld [smem:[#allocation3 + $0x17]]
    %s139 = sld [smem:[#allocation3 + $0x18]]
    %s140 = sld [smem:[#allocation3 + $0x19]]
    %s141 = sld [smem:[#allocation3 + $0x1a]]
    %s142 = sld [smem:[#allocation3 + $0x1b]]
    %s143 = sld [smem:[#allocation3 + $0x1c]]
    %s144 = sld [smem:[#allocation3 + $0x1d]]
    %s145 = sld [smem:[#allocation3 + $0x1e]]
    %s146 = sld [smem:[#allocation3 + $0x1f]]
    %s147 = sld [smem:[#allocation3 + $0x20]]
    %s148 = sld [smem:[#allocation3 + $0x21]]
    %s149 = sld [smem:[#allocation3 + $0x22]]
    %s150 = sld [smem:[#allocation3 + $0x23]]
    %s151 = sld [smem:[#allocation3 + $0x24]]
    %s152 = sld [smem:[#allocation3 + $0x25]]
    %s153 = sld [smem:[#allocation3 + $0x26]]
    %s154 = sld [smem:[#allocation3 + $0x27]]
    %s155 = sld [smem:[#allocation3 + $0x28]]
    %s156 = sld [smem:[#allocation3 + $0x29]]
    %s157 = sld [smem:[#allocation3 + $0x2a]]
    %s158 = sld [smem:[#allocation3 + $0x2b]]
    %s159 = sld [smem:[#allocation3 + $0x2c]]
    %s160 = sld [smem:[#allocation3 + $0x2d]]
    %s161 = sld [smem:[#allocation3 + $0x2e]]
    %s162 = sld [smem:[#allocation3 + $0x2f]]
    %s163 = sld [smem:[#allocation3 + $0x30]]
    %s164 = sld [smem:[#allocation2]]
    %vm165 = vcmp.ge.s32.totalorder %v111, 48
    %vm166 = vcmp.ge.s32.totalorder %v112, 48
    %vm167 = vcmp.lt.s32.totalorder %v111, 256
    %vm168 = vcmp.lt.s32.totalorder %v112, 256
    %vm169 = vmand %vm165, %vm167
    %vm170 = vmand %vm166, %vm168
    %vm171 = vcmp.ge.s32.totalorder %v113, 3
    %vm172 = vcmp.ge.s32.totalorder %v114, 3
    %vm173 = vcmp.lt.s32.totalorder %v113, 16
    %vm174 = vcmp.lt.s32.totalorder %v114, 16
    %vm175 = vmand %vm171, %vm173
    %vm176 = vmand %vm172, %vm174
    %vm177 = vcmp.ge.s32.totalorder %v111, 32
    %vm178 = vcmp.ge.s32.totalorder %v112, 32
    %vm179 = vmand %vm177, %vm167
    %vm180 = vmand %vm178, %vm168
    %vm181 = vcmp.ge.s32.totalorder %v113, 2
    %vm182 = vcmp.ge.s32.totalorder %v114, 2
    %vm183 = vmand %vm181, %vm173
    %vm184 = vmand %vm182, %vm174
    %vm185 = vcmp.ge.s32.totalorder %v111, 16
    %vm186 = vcmp.ge.s32.totalorder %v112, 16
    %vm187 = vmand %vm185, %vm167
    %vm188 = vmand %vm186, %vm168
    %vm189 = vcmp.ge.s32.totalorder %v113, 1
    %vm190 = vcmp.ge.s32.totalorder %v114, 1
    %vm191 = vmand %vm189, %vm173
    %vm192 = vmand %vm190, %vm174
    %vm193 = vcmp.ge.s32.totalorder %v111, 0
    %vm194 = vcmp.ge.s32.totalorder %v112, 0
    %vm195 = vcmp.lt.s32.totalorder %v111, 240
    %vm196 = vcmp.lt.s32.totalorder %v112, 240
    %vm197 = vmand %vm193, %vm195
    %vm198 = vmand %vm194, %vm196
    %vm199 = vcmp.ge.s32.totalorder %v113, 0
    %vm200 = vcmp.ge.s32.totalorder %v114, 0
    %vm201 = vcmp.lt.s32.totalorder %v113, 15
    %vm202 = vcmp.lt.s32.totalorder %v114, 15
    %vm203 = vmand %vm199, %vm201
    %vm204 = vmand %vm200, %vm202
    %vm205 = vcmp.lt.s32.totalorder %v111, 224
    %vm206 = vcmp.lt.s32.totalorder %v112, 224
    %vm207 = vmand %vm193, %vm205
    %vm208 = vmand %vm194, %vm206
    %vm209 = vcmp.lt.s32.totalorder %v113, 14
    %vm210 = vcmp.lt.s32.totalorder %v114, 14
    %vm211 = vmand %vm199, %vm209
    %vm212 = vmand %vm200, %vm210
    %vm213 = vcmp.lt.s32.totalorder %v111, 208
    %vm214 = vcmp.lt.s32.totalorder %v112, 208
    %vm215 = vmand %vm193, %vm213
    %vm216 = vmand %vm194, %vm214
    %vm217 = vcmp.lt.s32.totalorder %v113, 13
    %vm218 = vcmp.lt.s32.totalorder %v114, 13
    %vm219 = vmand %vm199, %vm217
    %vm220 = vmand %vm200, %vm218
    %vm225 = vcmask 1041409
    %v226 = vsel %vm225, %v108, %v106
    %v227 = vsel %vm225, %v109, %v107
    %230 = vrot.lane.b32.xlu0 %v226, 3
    %v231 = vpop.permute.xlu0 %230
    %232 = vrot.lane.b32.xlu0 %v227, 3
    %v233 = vpop.permute.xlu0 %232
    %vm234 = vcmp.lt.s32.totalorder %v111, 3
    %v235 = vsel %vm234, %v231, %v233
    %v236 = vsel %vm234, %v233, %v231
    %v237 = vsel %vm175, 1, 0
    %v238 = vsel %vm176, 1, 0
    %vm239 = vcmp.eq.s32.totalorder %v237, 1
    %vm240 = vcmp.eq.s32.totalorder %v238, 1
    %v241 = vsel %vm239, %v236, 0.0
    %v242 = vsel %vm240, %v235, 0.0
    %243 = vrot.lane.b32.xlu0 %v226, 2
    %v244 = vpop.permute.xlu0 %243
    %245 = vrot.lane.b32.xlu0 %v227, 2
    %v246 = vpop.permute.xlu0 %245
    %vm247 = vcmp.lt.s32.totalorder %v111, 2
    %v248 = vsel %vm247, %v244, %v246
    %v249 = vsel %vm247, %v246, %v244
    %v250 = vsel %vm183, 1, 0
    %v251 = vsel %vm184, 1, 0
    %vm252 = vcmp.eq.s32.totalorder %v250, 1
    %vm253 = vcmp.eq.s32.totalorder %v251, 1
    %v254 = vsel %vm252, %v249, 0.0
    %v255 = vsel %vm253, %v248, 0.0
    %256 = vrot.lane.b32.xlu0 %v226, 1
    %v257 = vpop.permute.xlu0 %256
    %258 = vrot.lane.b32.xlu0 %v227, 1
    %v259 = vpop.permute.xlu0 %258
    %vm260 = vcmp.lt.s32.totalorder %v111, 1
    %v261 = vsel %vm260, %v257, %v259
    %v262 = vsel %vm260, %v259, %v257
    %v263 = vsel %vm191, 1, 0
    %v264 = vsel %vm192, 1, 0
    %vm265 = vcmp.eq.s32.totalorder %v263, 1
    %vm266 = vcmp.eq.s32.totalorder %v264, 1
    %v267 = vsel %vm265, %v262, 0.0
    %v268 = vsel %vm266, %v261, 0.0
    %269 = vrot.lane.b32.xlu0 %v226, 127
    %v270 = vpop.permute.xlu0 %269
    %271 = vrot.lane.b32.xlu0 %v227, 127
    %v272 = vpop.permute.xlu0 %271
    %vm273 = vcmp.lt.s32.totalorder %v111, 127
    %v274 = vsel %vm273, %v270, %v272
    %v275 = vsel %vm273, %v272, %v270
    %v276 = vsel %vm203, 1, 0
    %v277 = vsel %vm204, 1, 0
    %vm278 = vcmp.eq.s32.totalorder %v276, 1
    %vm279 = vcmp.eq.s32.totalorder %v277, 1
    %v280 = vsel %vm278, %v274, 0.0
    %v281 = vsel %vm279, %v275, 0.0
    %282 = vrot.lane.b32.xlu0 %v226, 126
    %v283 = vpop.permute.xlu0 %282
    %284 = vrot.lane.b32.xlu0 %v227, 126
    %v285 = vpop.permute.xlu0 %284
    %vm286 = vcmp.lt.s32.totalorder %v111, 126
    %v287 = vsel %vm286, %v283, %v285
    %v288 = vsel %vm286, %v285, %v283
    %v289 = vsel %vm211, 1, 0
    %v290 = vsel %vm212, 1, 0
    %vm291 = vcmp.eq.s32.totalorder %v289, 1
    %vm292 = vcmp.eq.s32.totalorder %v290, 1
    %v293 = vsel %vm291, %v287, 0.0
    %v294 = vsel %vm292, %v288, 0.0
    %295 = vrot.lane.b32.xlu0 %v226, 125
    %v296 = vpop.permute.xlu0 %295
    %297 = vrot.lane.b32.xlu0 %v227, 125
    %v298 = vpop.permute.xlu0 %297
    %vm299 = vcmp.lt.s32.totalorder %v111, 125
    %v300 = vsel %vm299, %v296, %v298
    %v301 = vsel %vm299, %v298, %v296
    %v302 = vsel %vm219, 1, 0
    %v303 = vsel %vm220, 1, 0
    %vm304 = vcmp.eq.s32.totalorder %v302, 1
    %vm305 = vcmp.eq.s32.totalorder %v303, 1
    %v306 = vsel %vm304, %v300, 0.0
    %v307 = vsel %vm305, %v301, 0.0
    %v308 = vstv %s164
    %v309 = vstv %s115
    %v310 = vmul.f32 %v241, %v309
    %v311 = vmul.f32 %v242, %v309
    %v312 = vstv %s116
    %v313 = vmul.f32 %v254, %v312
    %v314 = vmul.f32 %v255, %v312
    %v315 = vadd.f32 %v310, %v313
    %v316 = vadd.f32 %v311, %v314
    %v317 = vstv %s117
    %v318 = vmul.f32 %v267, %v317
    %v319 = vmul.f32 %v268, %v317
    %v320 = vadd.f32 %v315, %v318
    %v321 = vadd.f32 %v316, %v319
    %v322 = vstv %s118
    %v323 = vmul.f32 %v106, %v322
    %v324 = vmul.f32 %v107, %v322
    %v325 = vmul.f32 %v108, %v322
    %v326 = vmul.f32 %v109, %v322
    %v331 = vsel %vm225, %v325, %v323
    %v332 = vsel %vm225, %v326, %v324
    %v335 = vadd.f32 %v320, %v331
    %v336 = vadd.f32 %v321, %v332
    %v337 = vstv %s119
    %v338 = vmul.f32 %v280, %v337
    %v339 = vmul.f32 %v281, %v337
    %v340 = vadd.f32 %v335, %v338
    %v341 = vadd.f32 %v336, %v339
    %v342 = vstv %s120
    %v343 = vmul.f32 %v293, %v342
    %v344 = vmul.f32 %v294, %v342
    %v345 = vadd.f32 %v340, %v343
    %v346 = vadd.f32 %v341, %v344
    %v347 = vstv %s121
    %v348 = vmul.f32 %v306, %v347
    %v349 = vmul.f32 %v307, %v347
    %v350 = vadd.f32 %v345, %v348
    %v351 = vadd.f32 %v346, %v349
    %352 = vrot.lane.b32.xlu0 %v350, 48
    %v353 = vpop.permute.xlu0 %352
    %354 = vrot.lane.b32.xlu0 %v351, 48
    %v355 = vpop.permute.xlu0 %354
    %vm356 = vcmp.lt.s32.totalorder %v111, 48
    %v357 = vsel %vm356, %v353, %v355
    %v358 = vsel %vm356, %v355, %v353
    %v359 = vsel %vm169, 1, 0
    %v360 = vsel %vm170, 1, 0
    %vm361 = vcmp.eq.s32.totalorder %v359, 1
    %vm362 = vcmp.eq.s32.totalorder %v360, 1
    %v363 = vsel %vm361, %v358, 0.0
    %v364 = vsel %vm362, %v357, 0.0
    %v365 = vadd.f32 %v308, %v363
    %v366 = vadd.f32 %v308, %v364
    %v367 = vstv %s122
    %v368 = vmul.f32 %v241, %v367
    %v369 = vmul.f32 %v242, %v367
    %v370 = vstv %s123
    %v371 = vmul.f32 %v254, %v370
    %v372 = vmul.f32 %v255, %v370
    %v373 = vadd.f32 %v368, %v371
    %v374 = vadd.f32 %v369, %v372
    %v375 = vstv %s124
    %v376 = vmul.f32 %v267, %v375
    %v377 = vmul.f32 %v268, %v375
    %v378 = vadd.f32 %v373, %v376
    %v379 = vadd.f32 %v374, %v377
    %v380 = vstv %s125
    %v381 = vmul.f32 %v106, %v380
    %v382 = vmul.f32 %v107, %v380
    %v383 = vmul.f32 %v108, %v380
    %v384 = vmul.f32 %v109, %v380
    %v389 = vsel %vm225, %v383, %v381
    %v390 = vsel %vm225, %v384, %v382
    %v393 = vadd.f32 %v378, %v389
    %v394 = vadd.f32 %v379, %v390
    %v395 = vstv %s126
    %v396 = vmul.f32 %v280, %v395
    %v397 = vmul.f32 %v281, %v395
    %v398 = vadd.f32 %v393, %v396
    %v399 = vadd.f32 %v394, %v397
    %v400 = vstv %s127
    %v401 = vmul.f32 %v293, %v400
    %v402 = vmul.f32 %v294, %v400
    %v403 = vadd.f32 %v398, %v401
    %v404 = vadd.f32 %v399, %v402
    %v405 = vstv %s128
    %v406 = vmul.f32 %v306, %v405
    %v407 = vmul.f32 %v307, %v405
    %v408 = vadd.f32 %v403, %v406
    %v409 = vadd.f32 %v404, %v407
    %410 = vrot.lane.b32.xlu0 %v408, 32
    %v411 = vpop.permute.xlu0 %410
    %412 = vrot.lane.b32.xlu0 %v409, 32
    %v413 = vpop.permute.xlu0 %412
    %vm414 = vcmp.lt.s32.totalorder %v111, 32
    %v415 = vsel %vm414, %v411, %v413
    %v416 = vsel %vm414, %v413, %v411
    %v417 = vsel %vm179, 1, 0
    %v418 = vsel %vm180, 1, 0
    %vm419 = vcmp.eq.s32.totalorder %v417, 1
    %vm420 = vcmp.eq.s32.totalorder %v418, 1
    %v421 = vsel %vm419, %v416, 0.0
    %v422 = vsel %vm420, %v415, 0.0
    %v423 = vadd.f32 %v365, %v421
    %v424 = vadd.f32 %v366, %v422
    %v425 = vstv %s129
    %v426 = vmul.f32 %v241, %v425
    %v427 = vmul.f32 %v242, %v425
    %v428 = vstv %s130
    %v429 = vmul.f32 %v254, %v428
    %v430 = vmul.f32 %v255, %v428
    %v431 = vadd.f32 %v426, %v429
    %v432 = vadd.f32 %v427, %v430
    %v433 = vstv %s131
    %v434 = vmul.f32 %v267, %v433
    %v435 = vmul.f32 %v268, %v433
    %v436 = vadd.f32 %v431, %v434
    %v437 = vadd.f32 %v432, %v435
    %v438 = vstv %s132
    %v439 = vmul.f32 %v106, %v438
    %v440 = vmul.f32 %v107, %v438
    %v441 = vmul.f32 %v108, %v438
    %v442 = vmul.f32 %v109, %v438
    %v447 = vsel %vm225, %v441, %v439
    %v448 = vsel %vm225, %v442, %v440
    %v451 = vadd.f32 %v436, %v447
    %v452 = vadd.f32 %v437, %v448
    %v453 = vstv %s133
    %v454 = vmul.f32 %v280, %v453
    %v455 = vmul.f32 %v281, %v453
    %v456 = vadd.f32 %v451, %v454
    %v457 = vadd.f32 %v452, %v455
    %v458 = vstv %s134
    %v459 = vmul.f32 %v293, %v458
    %v460 = vmul.f32 %v294, %v458
    %v461 = vadd.f32 %v456, %v459
    %v462 = vadd.f32 %v457, %v460
    %v463 = vstv %s135
    %v464 = vmul.f32 %v306, %v463
    %v465 = vmul.f32 %v307, %v463
    %v466 = vadd.f32 %v461, %v464
    %v467 = vadd.f32 %v462, %v465
    %468 = vrot.lane.b32.xlu0 %v466, 16
    %v469 = vpop.permute.xlu0 %468
    %470 = vrot.lane.b32.xlu0 %v467, 16
    %v471 = vpop.permute.xlu0 %470
    %vm472 = vcmp.lt.s32.totalorder %v111, 16
    %v473 = vsel %vm472, %v469, %v471
    %v474 = vsel %vm472, %v471, %v469
    %v475 = vsel %vm187, 1, 0
    %v476 = vsel %vm188, 1, 0
    %vm477 = vcmp.eq.s32.totalorder %v475, 1
    %vm478 = vcmp.eq.s32.totalorder %v476, 1
    %v479 = vsel %vm477, %v474, 0.0
    %v480 = vsel %vm478, %v473, 0.0
    %v481 = vadd.f32 %v423, %v479
    %v482 = vadd.f32 %v424, %v480
    %v483 = vstv %s136
    %v484 = vmul.f32 %v241, %v483
    %v485 = vmul.f32 %v242, %v483
    %v486 = vstv %s137
    %v487 = vmul.f32 %v254, %v486
    %v488 = vmul.f32 %v255, %v486
    %v489 = vadd.f32 %v484, %v487
    %v490 = vadd.f32 %v485, %v488
    %v491 = vstv %s138
    %v492 = vmul.f32 %v267, %v491
    %v493 = vmul.f32 %v268, %v491
    %v494 = vadd.f32 %v489, %v492
    %v495 = vadd.f32 %v490, %v493
    %v496 = vstv %s139
    %v497 = vmul.f32 %v106, %v496
    %v498 = vmul.f32 %v107, %v496
    %v499 = vmul.f32 %v108, %v496
    %v500 = vmul.f32 %v109, %v496
    %v505 = vsel %vm225, %v499, %v497
    %v506 = vsel %vm225, %v500, %v498
    %v509 = vadd.f32 %v494, %v505
    %v510 = vadd.f32 %v495, %v506
    %v511 = vstv %s140
    %v512 = vmul.f32 %v280, %v511
    %v513 = vmul.f32 %v281, %v511
    %v514 = vadd.f32 %v509, %v512
    %v515 = vadd.f32 %v510, %v513
    %v516 = vstv %s141
    %v517 = vmul.f32 %v293, %v516
    %v518 = vmul.f32 %v294, %v516
    %v519 = vadd.f32 %v514, %v517
    %v520 = vadd.f32 %v515, %v518
    %v521 = vstv %s142
    %v522 = vmul.f32 %v306, %v521
    %v523 = vmul.f32 %v307, %v521
    %v524 = vadd.f32 %v519, %v522
    %v525 = vadd.f32 %v520, %v523
    %v526 = vadd.f32 %v481, %v524
    %v527 = vadd.f32 %v482, %v525
    %v528 = vstv %s143
    %v529 = vmul.f32 %v241, %v528
    %v530 = vmul.f32 %v242, %v528
    %v531 = vstv %s144
    %v532 = vmul.f32 %v254, %v531
    %v533 = vmul.f32 %v255, %v531
    %v534 = vadd.f32 %v529, %v532
    %v535 = vadd.f32 %v530, %v533
    %v536 = vstv %s145
    %v537 = vmul.f32 %v267, %v536
    %v538 = vmul.f32 %v268, %v536
    %v539 = vadd.f32 %v534, %v537
    %v540 = vadd.f32 %v535, %v538
    %v541 = vstv %s146
    %v542 = vmul.f32 %v106, %v541
    %v543 = vmul.f32 %v107, %v541
    %v544 = vmul.f32 %v108, %v541
    %v545 = vmul.f32 %v109, %v541
    %v550 = vsel %vm225, %v544, %v542
    %v551 = vsel %vm225, %v545, %v543
    %v554 = vadd.f32 %v539, %v550
    %v555 = vadd.f32 %v540, %v551
    %v556 = vstv %s147
    %v557 = vmul.f32 %v280, %v556
    %v558 = vmul.f32 %v281, %v556
    %v559 = vadd.f32 %v554, %v557
    %v560 = vadd.f32 %v555, %v558
    %v561 = vstv %s148
    %v562 = vmul.f32 %v293, %v561
    %v563 = vmul.f32 %v294, %v561
    %v564 = vadd.f32 %v559, %v562
    %v565 = vadd.f32 %v560, %v563
    %v566 = vstv %s149
    %v567 = vmul.f32 %v306, %v566
    %v568 = vmul.f32 %v307, %v566
    %v569 = vadd.f32 %v564, %v567
    %v570 = vadd.f32 %v565, %v568
    %571 = vrot.lane.b32.xlu0 %v569, 112
    %v572 = vpop.permute.xlu0 %571
    %573 = vrot.lane.b32.xlu0 %v570, 112
    %v574 = vpop.permute.xlu0 %573
    %vm575 = vcmp.lt.s32.totalorder %v111, 112
    %v576 = vsel %vm575, %v572, %v574
    %v577 = vsel %vm575, %v574, %v572
    %v578 = vsel %vm197, 1, 0
    %v579 = vsel %vm198, 1, 0
    %vm580 = vcmp.eq.s32.totalorder %v578, 1
    %vm581 = vcmp.eq.s32.totalorder %v579, 1
    %v582 = vsel %vm580, %v576, 0.0
    %v583 = vsel %vm581, %v577, 0.0
    %v584 = vadd.f32 %v526, %v582
    %v585 = vadd.f32 %v527, %v583
    %v586 = vstv %s150
    %v587 = vmul.f32 %v241, %v586
    %v588 = vmul.f32 %v242, %v586
    %v589 = vstv %s151
    %v590 = vmul.f32 %v254, %v589
    %v591 = vmul.f32 %v255, %v589
    %v592 = vadd.f32 %v587, %v590
    %v593 = vadd.f32 %v588, %v591
    %v594 = vstv %s152
    %v595 = vmul.f32 %v267, %v594
    %v596 = vmul.f32 %v268, %v594
    %v597 = vadd.f32 %v592, %v595
    %v598 = vadd.f32 %v593, %v596
    %v599 = vstv %s153
    %v600 = vmul.f32 %v106, %v599
    %v601 = vmul.f32 %v107, %v599
    %v602 = vmul.f32 %v108, %v599
    %v603 = vmul.f32 %v109, %v599
    %v608 = vsel %vm225, %v602, %v600
    %v609 = vsel %vm225, %v603, %v601
    %v612 = vadd.f32 %v597, %v608
    %v613 = vadd.f32 %v598, %v609
    %v614 = vstv %s154
    %v615 = vmul.f32 %v280, %v614
    %v616 = vmul.f32 %v281, %v614
    %v617 = vadd.f32 %v612, %v615
    %v618 = vadd.f32 %v613, %v616
    %v619 = vstv %s155
    %v620 = vmul.f32 %v293, %v619
    %v621 = vmul.f32 %v294, %v619
    %v622 = vadd.f32 %v617, %v620
    %v623 = vadd.f32 %v618, %v621
    %v624 = vstv %s156
    %v625 = vmul.f32 %v306, %v624
    %v626 = vmul.f32 %v307, %v624
    %v627 = vadd.f32 %v622, %v625
    %v628 = vadd.f32 %v623, %v626
    %629 = vrot.lane.b32.xlu0 %v627, 96
    %v630 = vpop.permute.xlu0 %629
    %631 = vrot.lane.b32.xlu0 %v628, 96
    %v632 = vpop.permute.xlu0 %631
    %vm633 = vcmp.lt.s32.totalorder %v111, 96
    %v634 = vsel %vm633, %v630, %v632
    %v635 = vsel %vm633, %v632, %v630
    %v636 = vsel %vm207, 1, 0
    %v637 = vsel %vm208, 1, 0
    %vm638 = vcmp.eq.s32.totalorder %v636, 1
    %vm639 = vcmp.eq.s32.totalorder %v637, 1
    %v640 = vsel %vm638, %v634, 0.0
    %v641 = vsel %vm639, %v635, 0.0
    %v642 = vadd.f32 %v584, %v640
    %v643 = vadd.f32 %v585, %v641
    %v644 = vstv %s157
    %v645 = vmul.f32 %v241, %v644
    %v646 = vmul.f32 %v242, %v644
    %v647 = vstv %s158
    %v648 = vmul.f32 %v254, %v647
    %v649 = vmul.f32 %v255, %v647
    %v650 = vadd.f32 %v645, %v648
    %v651 = vadd.f32 %v646, %v649
    %v652 = vstv %s159
    %v653 = vmul.f32 %v267, %v652
    %v654 = vmul.f32 %v268, %v652
    %v655 = vadd.f32 %v650, %v653
    %v656 = vadd.f32 %v651, %v654
    %v657 = vstv %s160
    %v658 = vmul.f32 %v106, %v657
    %v659 = vmul.f32 %v107, %v657
    %v660 = vmul.f32 %v108, %v657
    %v661 = vmul.f32 %v109, %v657
    %v666 = vsel %vm225, %v660, %v658
    %v667 = vsel %vm225, %v661, %v659
    %v670 = vadd.f32 %v655, %v666
    %v671 = vadd.f32 %v656, %v667
    %v672 = vstv %s161
    %v673 = vmul.f32 %v280, %v672
    %v674 = vmul.f32 %v281, %v672
    %v675 = vadd.f32 %v670, %v673
    %v676 = vadd.f32 %v671, %v674
    %v677 = vstv %s162
    %v678 = vmul.f32 %v293, %v677
    %v679 = vmul.f32 %v294, %v677
    %v680 = vadd.f32 %v675, %v678
    %v681 = vadd.f32 %v676, %v679
    %v682 = vstv %s163
    %v683 = vmul.f32 %v306, %v682
    %v684 = vmul.f32 %v307, %v682
    %v685 = vadd.f32 %v680, %v683
    %v686 = vadd.f32 %v681, %v684
    %687 = vrot.lane.b32.xlu0 %v685, 80
    %v688 = vpop.permute.xlu0 %687
    %689 = vrot.lane.b32.xlu0 %v686, 80
    %v690 = vpop.permute.xlu0 %689
    %vm691 = vcmp.lt.s32.totalorder %v111, 80
    %v692 = vsel %vm691, %v688, %v690
    %v693 = vsel %vm691, %v690, %v688
    %v694 = vsel %vm215, 1, 0
    %v695 = vsel %vm216, 1, 0
    %vm696 = vcmp.eq.s32.totalorder %v694, 1
    %vm697 = vcmp.eq.s32.totalorder %v695, 1
    %v698 = vsel %vm696, %v692, 0.0
    %v699 = vsel %vm697, %v693, 0.0
    %v700 = vadd.f32 %v642, %v698
    %v701 = vadd.f32 %v643, %v699
    %v702 = vxor.u32 %v700, 2147483648
    %v703 = vxor.u32 %v701, 2147483648
    %v704 = vmul.f32 %v702, 1.442695
    %v705 = vpow.pop %v704
    %v706 = vmul.f32 %v703, 1.442695
    %v707 = vpow.pop %v706
    %v708 = vadd.f32 %v705, 1.0
    %v709 = vadd.f32 %v707, 1.0
    %v710 = vrcp.pop %v708
    %v711 = vmul.f32 1.0, %v710
    %v712 = vrcp.pop %v709
    %v713 = vmul.f32 1.0, %v712
    %v716 = vcombine.low %v711, %v713
    %v718 = vunpack.c.l.s4 1966171168
    %v719 = vunpack.c.0.s8 %v718
    %v720 = vlaneseq
    %v721 = vshrl.u32 %v720, 7
    %v722 = vsub.s32 %v719, %v721
    %v723 = vrot.slane %v716, %v722
    %v724 = vcombine.high %v723, %v723
    %v726 = vunpack.c.l.s4 1966171168
    %v727 = vunpack.c.0.s8 %v726
    %v728 = vlaneseq
    %v729 = vshrl.u32 %v728, 7
    %v730 = vsub.s32 %v727, %v729
    %v731 = vrot.slane %v723, %v730
    %v733 = vunpack.c.l.s4 1966171168
    %v734 = vunpack.c.0.s8 %v733
    %v735 = vlaneseq
    %v736 = vshrl.u32 %v735, 7
    %v737 = vsub.s32 %v734, %v736
    %v738 = vrot.slane %v724, %v737
    %v739 = vsub.f32 1.0, %v711
    %v740 = vsub.f32 1.0, %v713
    %v743 = vcombine.low %v739, %v740
    %v745 = vunpack.c.l.s4 1966171168
    %v746 = vunpack.c.0.s8 %v745
    %v747 = vlaneseq
    %v748 = vshrl.u32 %v747, 7
    %v749 = vsub.s32 %v746, %v748
    %v750 = vrot.slane %v743, %v749
    %v751 = vcombine.high %v750, %v750
    %v753 = vunpack.c.l.s4 1966171168
    %v754 = vunpack.c.0.s8 %v753
    %v755 = vlaneseq
    %v756 = vshrl.u32 %v755, 7
    %v757 = vsub.s32 %v754, %v756
    %v758 = vrot.slane %v750, %v757
    %v760 = vunpack.c.l.s4 1966171168
    %v761 = vunpack.c.0.s8 %v760
    %v762 = vlaneseq
    %v763 = vshrl.u32 %v762, 7
    %v764 = vsub.s32 %v761, %v763
    %v765 = vrot.slane %v751, %v764
    %v766 = vlaneseq
    %v767 = vshrl.u32 %v766, 7
    %v768 = vsub.s32 0, %v767
    %v769 = vrot.slane %v731, %v768
    %v770 = vlaneseq
    %v771 = vshrl.u32 %v770, 7
    %v772 = vsub.s32 1, %v771
    %v773 = vrot.slane %v731, %v772
    %v774 = vlaneseq
    %v775 = vshrl.u32 %v774, 7
    %v776 = vsub.s32 0, %v775
    %v777 = vrot.slane %v738, %v776
    %v778 = vlaneseq
    %v779 = vshrl.u32 %v778, 7
    %v780 = vsub.s32 1, %v779
    %v781 = vrot.slane %v738, %v780
    %v782 = vcombine.low %v769, %v773
    %v783 = vcombine.low %v777, %v781
    %v786 = vmul.f32 %v33, %v782
    %v787 = vmul.f32 %v34, %v783
    %788 = vst [vmem:[%s4] sm:$0xff] %v786
    %789 = vst [vmem:[%s4 + $0x8] sm:$0xff] %v787
    %v790 = vld [vmem:[%s3] sm:$0xff]
    %v791 = vld [vmem:[%s3 + $0x8] sm:$0xff]
    %v792 = vlaneseq
    %v793 = vshrl.u32 %v792, 7
    %v794 = vsub.s32 0, %v793
    %v795 = vrot.slane %v758, %v794
    %v796 = vlaneseq
    %v797 = vshrl.u32 %v796, 7
    %v798 = vsub.s32 1, %v797
    %v799 = vrot.slane %v758, %v798
    %v800 = vlaneseq
    %v801 = vshrl.u32 %v800, 7
    %v802 = vsub.s32 0, %v801
    %v803 = vrot.slane %v765, %v802
    %v804 = vlaneseq
    %v805 = vshrl.u32 %v804, 7
    %v806 = vsub.s32 1, %v805
    %v807 = vrot.slane %v765, %v806
    %v808 = vcombine.low %v795, %v799
    %v809 = vcombine.low %v803, %v807
    %v812 = vmul.f32 %v790, %v808
    %v813 = vmul.f32 %v791, %v809
    %814 = vst [vmem:[%s5] sm:$0xff] %v812
    %815 = vst [vmem:[%s5 + $0x8] sm:$0xff] %v813
    // Predicated region
    $region22: #{sam_forward.1} parent=1 // pred_check
      _
    $region23: #{sam_forward.1} parent=1 // pred_check_branch
      %817 = sbr.rel (0) target = $region25
    $region24: #{sam_forward.1} parent=1 // pred_region
      _
    $region25: #{sam_forward.1} parent=1 // pred_fallthru
      _
    // Predicated region
    $region26: #{sam_forward.1} parent=1 // pred_check
      _
    $region27: #{sam_forward.1} parent=1 // pred_check_branch
      %819 = sbr.rel (0) target = $region29
    $region28: #{sam_forward.1} parent=1 // pred_region
      _
    $region29: #{sam_forward.1} parent=1 // pred_fallthru
      _
    // Predicated region
    $region30: #{sam_forward.1} parent=1 // pred_check
      _
    $region31: #{sam_forward.1} parent=1 // pred_check_branch
      %821 = sbr.rel (0) target = $region33
    $region32: #{sam_forward.1} parent=1 // pred_region
      _
    $region33: #{sam_forward.1} parent=1 // pred_fallthru
      _
    // Predicated region
    $region34: #{sam_forward.1} parent=1 // pred_check
      _
    $region35: #{sam_forward.1} parent=1 // pred_check_branch
      %823 = sbr.rel (0) target = $region37
    $region36: #{sam_forward.1} parent=1 // pred_region
      _
    $region37: #{sam_forward.1} parent=1 // pred_fallthru
      _
    %824 = vsyncpa [#allocation4], 1

</llo_original>
